<compile_context>
chip_gen: v5e
topology: v5e:2x2
jax: 0.10.0
libtpu: 0.0.40
codegen_flags: <defaults>
</compile_context>

<pallas_src>
import jax
import jax.numpy as jnp
import numpy as np
from jax import lax
from jax.experimental import pallas as pl
from jax.experimental.pallas import tpu as pltpu


def _mlp_critic_kernel(x_ref, w1_ref, b1_ref, w2_ref, b2_ref, w3_ref, b3_ref, o_ref):
    x = x_ref[...]                                        # (tb, D) f32
    # fc1: h1^T = tanh(W1 @ x^T + b1). dot_general contracts the "in" dims of
    # both operands (a @ b^T), so the MXU consumes x in its natural layout.
    h1t = jnp.tanh(
        lax.dot_general(
            w1_ref[...], x, (((1,), (1,)), ((), ())),
            preferred_element_type=jnp.float32,
        )
        + b1_ref[...]                                     # (D, 1) broadcasts over tb
    )                                                     # (D, tb)
    # fc2: h2^T = tanh(W2 @ h1^T + b2)
    h2t = jnp.tanh(
        jnp.dot(w2_ref[...], h1t, preferred_element_type=jnp.float32)
        + b2_ref[...]
    )                                                     # (D, tb)
    # fc3: output width is 1, so an MXU matmul would use a single lane and pay
    # push/pop latency for nothing. Do VPU multiply + sublane (XLU) reduce; the
    # result is a lane-dense (1, tb) row -> unmasked full-width stores.
    out = jnp.sum(h2t * w3_ref[...], axis=0, keepdims=True) + b3_ref[0]
    o_ref[...] = out.astype(o_ref.dtype)


def _round_up(n, m):
    return ((n + m - 1) // m) * m


def _choose_batch_tile(batch):
    if batch <= 2048:
        # Single block equal to the full array dims: no (8,128) divisibility
        # requirement, no padding, no masked stores, one grid step of overhead.
        return batch
    # Large batch: big tiles (amortise the ~0.35 us/grid-step overhead), but at
    # least two tiles so v7x's "parallel" axis shards across both TensorCores.
    # tb is a multiple of 128 so the (1, tb) output block stores unmasked.
    return min(4096, _round_up(pl.cdiv(batch, 2), 128))


@jax.jit
def mlp_critic_forward(x, params):
    """x: (B, D) float32.

    params (PyTorch layouts): w1/w2 (D, D) as (out, in); b1/b2 (D, 1) columns;
    w3 (D, 1) (= fc3.weight.T, transposed once at init); b3 (1,).
    """
    B, D = x.shape
    w1, b1 = params["w1"], params["b1"]
    w2, b2 = params["w2"], params["b2"]
    w3, b3 = params["w3"], params["b3"]

    tb = _choose_batch_tile(B)
    num_tiles = pl.cdiv(B, tb)          # last block may be ragged; no padding

    const = lambda i: (0, 0)            # weights/biases resident across steps

    out = pl.pallas_call(
        _mlp_critic_kernel,
        out_shape=jax.ShapeDtypeStruct((1, B), jnp.float32),
        grid=(num_tiles,),
        in_specs=[
            pl.BlockSpec((tb, D), lambda i: (i, 0)),            # x: batch-tiled
            pl.BlockSpec((D, D), const),                        # w1
            pl.BlockSpec((D, 1), const),                        # b1 (column)
            pl.BlockSpec((D, D), const),                        # w2
            pl.BlockSpec((D, 1), const),                        # b2 (column)
            pl.BlockSpec((D, 1), const),                        # w3 (column)
            pl.BlockSpec(memory_space=pltpu.MemorySpace.SMEM),  # b3 scalar
        ],
        out_specs=pl.BlockSpec((1, tb), lambda i: (0, i)),      # lane-dense row
        compiler_params=pltpu.CompilerParams(
            dimension_semantics=("parallel",),                  # megacore on v7x
        ),
    )(x, w1, b1, w2, b2, w3, b3)

    # (1, B) -> (B, 1): pure reshape, no data movement.
    return out.reshape(B, 1)


def init_params(key, len_encoded_image, num_additional_states):
    """Deterministic init mimicking torch.nn.Linear default (+-1/sqrt(fan_in)).

    Weights kept in PyTorch (out, in) layout; biases and fc3.weight stored as
    (D, 1) columns (one free transpose at init) for the transposed kernel.
    """
    D = len_encoded_image + num_additional_states
    keys = jax.random.split(key, 6)
    bound = 1.0 / np.sqrt(D)

    def u(k, shape):
        return jax.random.uniform(k, shape, jnp.float32, -bound, bound)

    return {
        "w1": u(keys[0], (D, D)),   # (out, in)
        "b1": u(keys[1], (D, 1)),
        "w2": u(keys[2], (D, D)),   # (out, in)
        "b2": u(keys[3], (D, 1)),
        "w3": u(keys[4], (D, 1)),   # fc3.weight.T
        "b3": u(keys[5], (1,)),
    }


def _reference(x, p):
    h1 = jnp.tanh(x @ p["w1"].T + p["b1"].T)
    h2 = jnp.tanh(h1 @ p["w2"].T + p["b2"].T)
    return h2 @ p["w3"] + p["b3"]


if __name__ == "__main__":
    len_encoded_image = 24
    num_additional_states = 8
    D = len_encoded_image + num_additional_states  # 32

    key = jax.random.PRNGKey(0)
    kx, kp, kx2, kx3 = jax.random.split(key, 4)
    params = init_params(kp, len_encoded_image, num_additional_states)

    # Main check at the module's natural small size.
    B = 8
    x = jax.random.normal(kx, (B, D), jnp.float32)
    out = jax.block_until_ready(mlp_critic_forward(x, params))
    ref = _reference(x, params)
    assert out.shape == (B, 1), out.shape
    np.testing.assert_allclose(np.asarray(out), np.asarray(ref), rtol=1e-5, atol=1e-5)

    # Batch not a multiple of 8: single full-array block, no padding needed.
    x2 = jax.random.normal(kx2, (20, D), jnp.float32)
    out2 = jax.block_until_ready(mlp_critic_forward(x2, params))
    ref2 = _reference(x2, params)
    assert out2.shape == (20, 1), out2.shape
    np.testing.assert_allclose(np.asarray(out2), np.asarray(ref2), rtol=1e-5, atol=1e-5)

    # Multi-tile path with a ragged last block (no padding; masked tail lanes).
    x3 = jax.random.normal(kx3, (2500, D), jnp.float32)
    out3 = jax.block_until_ready(mlp_critic_forward(x3, params))
    ref3 = _reference(x3, params)
    assert out3.shape == (2500, 1), out3.shape
    np.testing.assert_allclose(np.asarray(out3), np.asarray(ref3), rtol=1e-5, atol=1e-5)

    print("KERNEL_OK")
</pallas_src>

<mosaic_0001>
module attributes {stable_mosaic.version = 11 : i64} {
  func.func @_mlp_critic_kernel(%arg0: i32, %arg1: memref<8x32xf32, #tpu.memory_space<vmem>>, %arg2: memref<32x32xf32, #tpu.memory_space<vmem>>, %arg3: memref<32x1xf32, #tpu.memory_space<vmem>>, %arg4: memref<32x32xf32, #tpu.memory_space<vmem>>, %arg5: memref<32x1xf32, #tpu.memory_space<vmem>>, %arg6: memref<32x1xf32, #tpu.memory_space<vmem>>, %arg7: memref<1xf32, #tpu.memory_space<smem>>, %arg8: memref<1x8xf32, #tpu.memory_space<vmem>>) attributes {dimension_semantics = [#tpu.dimension_semantics<parallel>], iteration_bounds = array<i64: 1>, scalar_prefetch = 0 : i64, scratch_operands = 0 : i64, tpu.core_type = #tpu.core_type<tc>, window_params = [{transform_indices = @transform_0, window_bounds = array<i64: 8, 32>}, {pipeline_mode = #tpu.pipeline_mode<synchronous>, transform_indices = @transform_1, window_bounds = array<i64: 32, 32>}, {pipeline_mode = #tpu.pipeline_mode<synchronous>, transform_indices = @transform_2, window_bounds = array<i64: 32, 1>}, {pipeline_mode = #tpu.pipeline_mode<synchronous>, transform_indices = @transform_3, window_bounds = array<i64: 32, 32>}, {pipeline_mode = #tpu.pipeline_mode<synchronous>, transform_indices = @transform_4, window_bounds = array<i64: 32, 1>}, {pipeline_mode = #tpu.pipeline_mode<synchronous>, transform_indices = @transform_5, window_bounds = array<i64: 32, 1>}, {transform_indices = @transform_6, window_bounds = array<i64: 1>}, {transform_indices = @transform_7, window_bounds = array<i64: 1, 8>}]} {
    %c0 = arith.constant 0 : index
    %c0_0 = arith.constant 0 : index
    %0 = vector.load %arg1[%c0, %c0_0] : memref<8x32xf32, #tpu.memory_space<vmem>>, vector<8x32xf32>
    %c0_1 = arith.constant 0 : index
    %c0_2 = arith.constant 0 : index
    %1 = vector.load %arg2[%c0_1, %c0_2] : memref<32x32xf32, #tpu.memory_space<vmem>>, vector<32x32xf32>
    %cst = arith.constant dense<0.000000e+00> : vector<32x8xf32>
    %2 = tpu.matmul %1, %0, %cst {dimension_numbers = #tpu.dot_dimension_numbers<[1], [1], [0], [0], [0, 0, 1, 0], [], []>} : vector<32x32xf32>, vector<8x32xf32>, vector<32x8xf32> -> vector<32x8xf32>
    %c0_3 = arith.constant 0 : index
    %c0_4 = arith.constant 0 : index
    %3 = vector.load %arg3[%c0_3, %c0_4] : memref<32x1xf32, #tpu.memory_space<vmem>>, vector<32x1xf32>
    %4 = vector.broadcast %3 : vector<32x1xf32> to vector<32x8xf32>
    %5 = arith.addf %2, %4 : vector<32x8xf32>
    %6 = math.tanh %5 : vector<32x8xf32>
    %c0_5 = arith.constant 0 : index
    %c0_6 = arith.constant 0 : index
    %7 = vector.load %arg4[%c0_5, %c0_6] : memref<32x32xf32, #tpu.memory_space<vmem>>, vector<32x32xf32>
    %cst_7 = arith.constant dense<0.000000e+00> : vector<32x8xf32>
    %8 = tpu.matmul %7, %6, %cst_7 {dimension_numbers = #tpu.dot_dimension_numbers<[1], [0], [0], [1], [0, 0, 1, 1], [], []>} : vector<32x32xf32>, vector<32x8xf32>, vector<32x8xf32> -> vector<32x8xf32>
    %c0_8 = arith.constant 0 : index
    %c0_9 = arith.constant 0 : index
    %9 = vector.load %arg5[%c0_8, %c0_9] : memref<32x1xf32, #tpu.memory_space<vmem>>, vector<32x1xf32>
    %10 = vector.broadcast %9 : vector<32x1xf32> to vector<32x8xf32>
    %11 = arith.addf %8, %10 : vector<32x8xf32>
    %12 = math.tanh %11 : vector<32x8xf32>
    %c0_10 = arith.constant 0 : index
    %c0_11 = arith.constant 0 : index
    %13 = vector.load %arg6[%c0_10, %c0_11] : memref<32x1xf32, #tpu.memory_space<vmem>>, vector<32x1xf32>
    %14 = vector.broadcast %13 : vector<32x1xf32> to vector<32x8xf32>
    %15 = arith.mulf %12, %14 : vector<32x8xf32>
    %cst_12 = arith.constant dense<0.000000e+00> : vector<8xf32>
    %16 = vector.multi_reduction <add>, %15, %cst_12 [0] : vector<32x8xf32> to vector<8xf32>
    %17 = vector.shape_cast %16 : vector<8xf32> to vector<1x8xf32>
    %c0_13 = arith.constant 0 : index
    %18 = memref.load %arg7[%c0_13] : memref<1xf32, #tpu.memory_space<smem>>
    %19 = vector.broadcast %18 : f32 to vector<1x8xf32>
    %20 = arith.addf %17, %19 : vector<1x8xf32>
    %c0_14 = arith.constant 0 : index
    %c0_15 = arith.constant 0 : index
    %21 = vector.load %arg8[%c0_14, %c0_15] : memref<1x8xf32, #tpu.memory_space<vmem>>, vector<1x8xf32>
    tpu.vector_store %arg8[%c0_14, %c0_15], %20 {strides = array<i32>} : memref<1x8xf32, #tpu.memory_space<vmem>>, vector<1x8xf32>,
    return
  }
  func.func @transform_0(%arg0: i32) -> (i32, i32) {
    %c0_i32 = arith.constant 0 : i32
    %c0_i32_0 = arith.constant 0 : i32
    return %arg0, %c0_i32 : i32, i32
  }
  func.func @transform_1(%arg0: i32) -> (i32, i32) {
    %c0_i32 = arith.constant 0 : i32
    %c0_i32_0 = arith.constant 0 : i32
    %c0_i32_1 = arith.constant 0 : i32
    return %c0_i32, %c0_i32_0 : i32, i32
  }
  func.func @transform_2(%arg0: i32) -> (i32, i32) {
    %c0_i32 = arith.constant 0 : i32
    %c0_i32_0 = arith.constant 0 : i32
    %c0_i32_1 = arith.constant 0 : i32
    return %c0_i32, %c0_i32_0 : i32, i32
  }
  func.func @transform_3(%arg0: i32) -> (i32, i32) {
    %c0_i32 = arith.constant 0 : i32
    %c0_i32_0 = arith.constant 0 : i32
    %c0_i32_1 = arith.constant 0 : i32
    return %c0_i32, %c0_i32_0 : i32, i32
  }
  func.func @transform_4(%arg0: i32) -> (i32, i32) {
    %c0_i32 = arith.constant 0 : i32
    %c0_i32_0 = arith.constant 0 : i32
    %c0_i32_1 = arith.constant 0 : i32
    return %c0_i32, %c0_i32_0 : i32, i32
  }
  func.func @transform_5(%arg0: i32) -> (i32, i32) {
    %c0_i32 = arith.constant 0 : i32
    %c0_i32_0 = arith.constant 0 : i32
    %c0_i32_1 = arith.constant 0 : i32
    return %c0_i32, %c0_i32_0 : i32, i32
  }
  func.func @transform_6(%arg0: i32) -> i32 {
    %c0_i32 = arith.constant 0 : i32
    %c0_i32_0 = arith.constant 0 : i32
    return %c0_i32 : i32
  }
  func.func @transform_7(%arg0: i32) -> (i32, i32) {
    %c0_i32 = arith.constant 0 : i32
    %c0_i32_0 = arith.constant 0 : i32
    return %c0_i32, %arg0 : i32, i32
  }
}

</mosaic_0001>

<llo_original>
// kernel: mlp_critic_forward.1
$region0: #{mlp_critic_forward.1}
  #allocation0 [shape = 'u32[]', space=smem, size = 0x4, offset = 0x4, fixed_abs, tag = 'smem constant byte address 0x4 - core index']
  #allocation1 [shape = 'u32[72,128]{1,0:T(1,128)}', space=vmem, size = 0x9000, scoped, tag = 'internal scratch']
  #allocation2 [shape = 'f32[1]{0:T(128)S(6)}', space=smem, size = 0x200, scoped, tag = 'scoped memory for mlp_critic_forward.1']
  %s0 = inlined_call_operand.vmem [shape: f32[8,32], index: 0, kind: input, shape index: {}]
  %s1 = inlined_call_operand.vmem [shape: f32[32,32], index: 1, kind: input, shape index: {}]
  %s2 = inlined_call_operand.vmem [shape: f32[32,1], index: 2, kind: input, shape index: {}]
  %s3 = inlined_call_operand.vmem [shape: f32[32,32], index: 3, kind: input, shape index: {}]
  %s4 = inlined_call_operand.vmem [shape: f32[32,1], index: 4, kind: input, shape index: {}]
  %s5 = inlined_call_operand.vmem [shape: f32[32,1], index: 5, kind: input, shape index: {}]
  %s6 = inlined_call_operand.<no memory space> [shape: f32[1], index: 6, kind: input, shape index: {}]
  %s7 = inlined_call_operand.hbm [shape: f32[1,8], index: 7, kind: output, shape index: {}]
  %s8 = sld [smem:[#allocation0]]
  $region38: #{mlp_critic_forward.1} parent=0
    _
  %s10 = ssub.s32 1, %s8
  %s11 = scalar_select 0, %s10, %s8
  %12 = sst [smem:[#allocation2]] %s6
  $region1: #{mlp_critic_forward.1} parent=0
    #allocation3 [shape = 'u8[512]{0}', space=vmem, size = 0x400, scoped, tag = 'output window, operand 0, single buffered']
    #allocation4 [shape = 's32[1]{0}', space=sflag, size = 0x4, scoped, tag = 'scoped memory for mlp_critic_forward.1']
    %13 = vsyncpa [#allocation4], 0
    // Predicated region
    $region2: #{mlp_critic_forward.1} parent=1 // pred_check
      _
    $region3: #{mlp_critic_forward.1} parent=1 // pred_check_branch
      %15 = sbr.rel (0) target = $region5
    $region4: #{mlp_critic_forward.1} parent=1 // pred_region
      _
    $region5: #{mlp_critic_forward.1} parent=1 // pred_fallthru
      _
    // Predicated region
    $region6: #{mlp_critic_forward.1} parent=1 // pred_check
      _
    $region7: #{mlp_critic_forward.1} parent=1 // pred_check_branch
      %17 = sbr.rel (0) target = $region9
    $region8: #{mlp_critic_forward.1} parent=1 // pred_region
      _
    $region9: #{mlp_critic_forward.1} parent=1 // pred_fallthru
      _
    // Predicated region
    $region10: #{mlp_critic_forward.1} parent=1 // pred_check
      _
    $region11: #{mlp_critic_forward.1} parent=1 // pred_check_branch
      %19 = sbr.rel (0) target = $region13
    $region12: #{mlp_critic_forward.1} parent=1 // pred_region
      _
    $region13: #{mlp_critic_forward.1} parent=1 // pred_fallthru
      _
    // Predicated region
    $region14: #{mlp_critic_forward.1} parent=1 // pred_check
      _
    $region15: #{mlp_critic_forward.1} parent=1 // pred_check_branch
      %21 = sbr.rel (0) target = $region17
    $region16: #{mlp_critic_forward.1} parent=1 // pred_region
      _
    $region17: #{mlp_critic_forward.1} parent=1 // pred_fallthru
      _
    // Predicated region
    $region18: #{mlp_critic_forward.1} parent=1 // pred_check
      _
    $region19: #{mlp_critic_forward.1} parent=1 // pred_check_branch
      %23 = sbr.rel (0) target = $region21
    $region20: #{mlp_critic_forward.1} parent=1 // pred_region
      _
    $region21: #{mlp_critic_forward.1} parent=1 // pred_fallthru
      _
    // Predicated region
    $region22: #{mlp_critic_forward.1} parent=1 // pred_check
      _
    $region23: #{mlp_critic_forward.1} parent=1 // pred_check_branch
      %25 = sbr.rel (0) target = $region25
    $region24: #{mlp_critic_forward.1} parent=1 // pred_region
      _
    $region25: #{mlp_critic_forward.1} parent=1 // pred_fallthru
      _
    // Predicated region
    $region26: #{mlp_critic_forward.1} parent=1 // pred_check
      _
    $region27: #{mlp_critic_forward.1} parent=1 // pred_check_branch
      %27 = sbr.rel (0) target = $region29
    $region28: #{mlp_critic_forward.1} parent=1 // pred_region
      _
    $region29: #{mlp_critic_forward.1} parent=1 // pred_fallthru
      _
    %v28 = vld [vmem:[%s0] sm:$0xff]
    %v29 = vld [vmem:[%s1] sm:$0xff]
    %v30 = vld [vmem:[%s1 + $0x8] sm:$0xff]
    %v31 = vld [vmem:[%s1 + $0x10] sm:$0xff]
    %v32 = vld [vmem:[%s1 + $0x18] sm:$0xff]
    %v33 = vld [vmem:[%s2] sm:$0xff]
    %v34 = vld [vmem:[%s2 + $0x8] sm:$0xff]
    %v35 = vld [vmem:[%s2 + $0x10] sm:$0xff]
    %v36 = vld [vmem:[%s2 + $0x18] sm:$0xff]
    %38 = vset.pattern.permute.xlu0 0
    %39 = vperm.xlu0 %38, %v33
    %v40 = vpop.permute.xlu0 %39
    %43 = vset.pattern.permute.xlu0 0
    %44 = vperm.xlu0 %43, %v34
    %v45 = vpop.permute.xlu0 %44
    %48 = vset.pattern.permute.xlu0 0
    %49 = vperm.xlu0 %48, %v35
    %v50 = vpop.permute.xlu0 %49
    %53 = vset.pattern.permute.xlu0 0
    %54 = vperm.xlu0 %53, %v36
    %v55 = vpop.permute.xlu0 %54
    %vm57 = vcmask 261120
    %v59 = vsel %vm57, %v29, 0
    %v62 = vsel %vm57, %v30, 0
    %v65 = vsel %vm57, %v31, 0
    %v68 = vsel %vm57, %v32, 0
    %v71 = vsel %vm57, %v28, 0
    %73 = vmatpush.xpose.msra.mxu0 0.0
    %74 = vmatpush.xpose.msra.mxu0 0.0
    %75 = vmatpush.xpose.msra.mxu0 0.0
    %76 = vmatpush.xpose.msra.mxu0 0.0
    %77 = vmatpush.xpose.msra.mxu0 0.0
    %78 = vmatpush.xpose.msra.mxu0 0.0
    %79 = vmatpush.xpose.msra.mxu0 0.0
    %80 = vmatpush.xpose.msra.mxu0 0.0
    %81 = vmatpush.xpose.msra.mxu0 0.0
    %82 = vmatpush.xpose.msra.mxu0 0.0
    %83 = vmatpush.xpose.msra.mxu0 0.0
    %84 = vmatpush.xpose.msra.mxu0 0.0
    %85 = vmatpush.xpose.msra.mxu0 0.0
    %86 = vmatpush.xpose.msra.mxu0 0.0
    %87 = vmatpush.xpose.msra.mxu0 0.0
    %88 = vmatpush.xpose.msra.mxu0 %v71
    %89 = vmatmul.f32.gmra.mxu0 %v59
    %v90 = vpop.f32.mrf.mxu0
    %v91 = vadd.f32 %v40, %v90
    %92 = vmatmul.f32.gmra.mxu0 %v62
    %v93 = vpop.f32.mrf.mxu0
    %v94 = vadd.f32 %v45, %v93
    %95 = vmatmul.f32.gmra.mxu0 %v65
    %v96 = vpop.f32.mrf.mxu0
    %v97 = vadd.f32 %v50, %v96
    %98 = vmatmul.f32.gmra.mxu0 %v68
    %v99 = vpop.f32.mrf.mxu0
    %v100 = vadd.f32 %v55, %v99
    %101 = vdwg.mxu0
    %v102 = vtanh.pop %v91
    %v103 = vtanh.pop %v94
    %v104 = vtanh.pop %v97
    %v105 = vtanh.pop %v100
    %v106 = vld [vmem:[%s3] sm:$0xff]
    %v107 = vld [vmem:[%s3 + $0x8] sm:$0xff]
    %v108 = vld [vmem:[%s3 + $0x10] sm:$0xff]
    %v109 = vld [vmem:[%s3 + $0x18] sm:$0xff]
    %v110 = vld [vmem:[%s4] sm:$0xff]
    %v111 = vld [vmem:[%s4 + $0x8] sm:$0xff]
    %v112 = vld [vmem:[%s4 + $0x10] sm:$0xff]
    %v113 = vld [vmem:[%s4 + $0x18] sm:$0xff]
    %115 = vset.pattern.permute.xlu0 0
    %116 = vperm.xlu0 %115, %v110
    %v117 = vpop.permute.xlu0 %116
    %120 = vset.pattern.permute.xlu0 0
    %121 = vperm.xlu0 %120, %v111
    %v122 = vpop.permute.xlu0 %121
    %125 = vset.pattern.permute.xlu0 0
    %126 = vperm.xlu0 %125, %v112
    %v127 = vpop.permute.xlu0 %126
    %130 = vset.pattern.permute.xlu0 0
    %131 = vperm.xlu0 %130, %v113
    %v132 = vpop.permute.xlu0 %131
    %v135 = vsel %vm57, %v106, 0
    %v138 = vsel %vm57, %v107, 0
    %v141 = vsel %vm57, %v108, 0
    %v144 = vsel %vm57, %v109, 0
    %146 = vmatpush.msra.mxu0 0.0
    %147 = vmatpush.msra.mxu0 0.0
    %148 = vmatpush.msra.mxu0 0.0
    %149 = vmatpush.msra.mxu0 0.0
    %150 = vmatpush.msra.mxu0 0.0
    %151 = vmatpush.msra.mxu0 0.0
    %152 = vmatpush.msra.mxu0 0.0
    %153 = vmatpush.msra.mxu0 0.0
    %154 = vmatpush.msra.mxu0 0.0
    %155 = vmatpush.msra.mxu0 0.0
    %156 = vmatpush.msra.mxu0 0.0
    %157 = vmatpush.msra.mxu0 0.0
    %158 = vmatpush.msra.mxu0 %v105
    %159 = vmatpush.msra.mxu0 %v104
    %160 = vmatpush.msra.mxu0 %v103
    %161 = vmatpush.msra.mxu0 %v102
    %162 = vmatmul.f32.gmra.mxu0 %v135
    %v163 = vpop.f32.mrf.mxu0
    %v164 = vadd.f32 %v117, %v163
    %165 = vmatmul.f32.gmra.mxu0 %v138
    %v166 = vpop.f32.mrf.mxu0
    %v167 = vadd.f32 %v122, %v166
    %168 = vmatmul.f32.gmra.mxu0 %v141
    %v169 = vpop.f32.mrf.mxu0
    %v170 = vadd.f32 %v127, %v169
    %171 = vmatmul.f32.gmra.mxu0 %v144
    %v172 = vpop.f32.mrf.mxu0
    %v173 = vadd.f32 %v132, %v172
    %174 = vdwg.mxu0
    %v175 = vtanh.pop %v164
    %v176 = vtanh.pop %v167
    %v177 = vtanh.pop %v170
    %v178 = vtanh.pop %v173
    %v179 = vld [vmem:[%s5] sm:$0xff]
    %v180 = vld [vmem:[%s5 + $0x8] sm:$0xff]
    %v181 = vld [vmem:[%s5 + $0x10] sm:$0xff]
    %v182 = vld [vmem:[%s5 + $0x18] sm:$0xff]
    %184 = vset.pattern.permute.xlu0 0
    %185 = vperm.xlu0 %184, %v179
    %v186 = vpop.permute.xlu0 %185
    %189 = vset.pattern.permute.xlu0 0
    %190 = vperm.xlu0 %189, %v180
    %v191 = vpop.permute.xlu0 %190
    %194 = vset.pattern.permute.xlu0 0
    %195 = vperm.xlu0 %194, %v181
    %v196 = vpop.permute.xlu0 %195
    %199 = vset.pattern.permute.xlu0 0
    %200 = vperm.xlu0 %199, %v182
    %v201 = vpop.permute.xlu0 %200
    %v203 = vmul.f32 %v175, %v186
    %v204 = vmul.f32 %v176, %v191
    %v205 = vmul.f32 %v177, %v196
    %v206 = vmul.f32 %v178, %v201
    %vm207 = vcmask 64512
    %v208 = vsel %vm207, %v203, 0.0
    %v209 = vsel %vm207, %v204, 0.0
    %v210 = vadd.f32 %v208, %v209
    %v211 = vsel %vm207, %v205, 0.0
    %v212 = vadd.f32 %v210, %v211
    %v213 = vsel %vm207, %v206, 0.0
    %v214 = vadd.f32 %v212, %v213
    %v215 = vrot.slane %v214, 4
    %v216 = vadd.f32 %v214, %v215
    %v217 = vrot.slane %v216, 2
    %v218 = vadd.f32 %v216, %v217
    %v219 = vrot.slane %v218, 1
    %v220 = vadd.f32 %v218, %v219
    %s221 = sld [smem:[#allocation2]]
    %v222 = vstv %s221
    %v223 = vadd.f32 %v220, %v222
    %vm224 = vcmask 57344
    %225 = vst.msk [vmem:[#allocation3] sm:$0x1] %vm224, %v223
    // Predicated region
    $region30: #{mlp_critic_forward.1} parent=1 // pred_check
      _
    $region31: #{mlp_critic_forward.1} parent=1 // pred_check_branch
      %227 = sbr.rel (0) target = $region33
    $region32: #{mlp_critic_forward.1} parent=1 // pred_region
      %229 = vsyncadd [#allocation4], 0
      %s231 = sshll.u32 [#allocation3], 4
      %s232 = int_to_ptr.vmem [resolvable:$true] %s231
      %s233 = sshll.u32 %s7, 4
      %s234 = int_to_ptr.hbm [resolvable:$true] %s233
      %236 = dma.vmem_to_hbm [thread:$0]  %s232, 16, %s234, [#allocation4]
    $region33: #{mlp_critic_forward.1} parent=1 // pred_fallthru
      _
    // Predicated region
    $region34: #{mlp_critic_forward.1} parent=1 // pred_check
      _
    $region35: #{mlp_critic_forward.1} parent=1 // pred_check_branch
      %238 = sbr.rel (0) target = $region37
    $region36: #{mlp_critic_forward.1} parent=1 // pred_region
      %240 = dma.done [#allocation4], 16
    $region37: #{mlp_critic_forward.1} parent=1 // pred_fallthru
      _
    %241 = vsyncpa [#allocation4], 1

</llo_original>
